<compile_context>
chip_gen: v7x
topology: tpu7x:2x2x1
jax: 0.10.0
libtpu: 0.0.40
codegen_flags: <defaults>
</compile_context>

<pallas_src>
import functools

import jax
import jax.numpy as jnp
from jax.experimental import pallas as pl
from jax.experimental.pallas import tpu as pltpu

_LANES = 128
_PALLAS_MIN_N = 1024  # below this, plain XLA beats a kernel launch


def _round_up(x, m):
    return ((x + m - 1) // m) * m


def _sbp_loss_kernel(pred_ref, targ_ref, out_ref, *, rows, br, bpc):
    # pred_ref / targ_ref : (br, 128) tiles in VMEM (f32 or bf16)
    # out_ref             : (1, 1, 128) f32 per-core partial-sum block (resident
    #                       across the inner reduction axis -> acts as accumulator)
    c = pl.program_id(0)  # core-split axis ("parallel")
    i = pl.program_id(1)  # streaming reduction axis ("arbitrary")

    @pl.when(i == 0)
    def _init():
        out_ref[...] = jnp.zeros_like(out_ref)

    p = pred_ref[...].astype(jnp.float32)
    t = targ_ref[...].astype(jnp.float32)
    err = jnp.abs((t - p) / t)  # exact divide: kernel is DMA-bound, approx buys nothing

    # Mask rows past the logical end of the stream.  Covers (a) the ragged final
    # block and (b) duplicated blocks from the uneven 2-core split (index_map clamps
    # the block index, so those steps re-read valid data but contribute 0).
    # jnp.where is a select: inf/nan from garbage rows cannot propagate.
    row0 = (c * bpc + i) * br
    grow = row0 + jax.lax.broadcasted_iota(jnp.int32, (br, _LANES), 0)
    err = jnp.where(grow < rows, err, 0.0)

    # Fold the tile into a tiny resident (1,128) accumulator; the sublane reduce is
    # free under the DMA-bound pipeline.  Final cross-lane sum happens in the wrapper.
    out_ref[0] += jnp.sum(err, axis=0, keepdims=True)


def sbp_loss(predictions, targets, *, block_rows=2048, force_pallas=False):
    """Pallas equivalent of sbpLoss.forward(predictions, targets)."""
    # Mirror torch.squeeze(predictions)
    pred = jnp.squeeze(jnp.asarray(predictions))
    if pred.ndim == 0:
        pred = pred.reshape(1)
    targ = jnp.asarray(targets).reshape(pred.shape)

    # Keep bf16 inputs narrow (halves HBM traffic); everything else runs f32.
    def _canon(x):
        return x if x.dtype == jnp.bfloat16 else x.astype(jnp.float32)

    pred, targ = _canon(pred), _canon(targ)
    n = pred.shape[0]

    # Tiny batches: kernel launch + DMA overhead dominates — let XLA fuse it.
    if n < _PALLAS_MIN_N and not force_pallas:
        p32 = pred.astype(jnp.float32)
        t32 = targ.astype(jnp.float32)
        return jnp.mean(jnp.abs((t32 - p32) / t32))

    # --- lane-dense layout; no full-array pad when N is already lane-aligned -------
    rem = n % _LANES
    if rem:
        # TODO(synk): this residual copy only happens when N % 128 != 0.
        pad = _LANES - rem
        pred = jnp.concatenate([pred, jnp.ones((pad,), pred.dtype)])
        targ = jnp.concatenate([targ, jnp.ones((pad,), targ.dtype)])
    rows = pl.cdiv(n, _LANES)
    pred2d = pred.reshape(rows, _LANES)   # free bitcast (contiguous row-major)
    targ2d = targ.reshape(rows, _LANES)

    # Block size: multiple of the sublane packing (8 for f32, 16 for bf16), clamped
    # so we never make the block absurdly larger than the array.
    sub = 16 if (pred.dtype == jnp.bfloat16 or targ.dtype == jnp.bfloat16) else 8
    br = max(sub, _round_up(min(int(block_rows), rows), sub))
    total_blocks = pl.cdiv(rows, br)

    # v7x: split the stream over both TensorCores; serial no-op on v5e/v6e.
    ncores = 2 if total_blocks >= 2 else 1
    bpc = pl.cdiv(total_blocks, ncores)  # blocks per core

    kernel = functools.partial(_sbp_loss_kernel, rows=rows, br=br, bpc=bpc)
    in_map = lambda c, i: (jnp.minimum(c * bpc + i, total_blocks - 1), 0)

    partials = pl.pallas_call(
        kernel,
        out_shape=jax.ShapeDtypeStruct((ncores, 1, _LANES), jnp.float32),
        grid_spec=pltpu.PrefetchScalarGridSpec(
            num_scalar_prefetch=0,
            grid=(ncores, bpc),
            in_specs=[
                pl.BlockSpec((br, _LANES), in_map),
                pl.BlockSpec((br, _LANES), in_map),
            ],
            out_specs=pl.BlockSpec((1, 1, _LANES), lambda c, i: (c, 0, 0)),
        ),
        compiler_params=pltpu.CompilerParams(
            dimension_semantics=("parallel", "arbitrary"),
            vmem_limit_bytes=32 * 1024 * 1024,
        ),
    )(pred2d, targ2d)

    return jnp.sum(partials) / n


def _reference(predictions, targets):
    pred = jnp.squeeze(jnp.asarray(predictions)).astype(jnp.float32)
    targ = jnp.asarray(targets).astype(jnp.float32)
    return jnp.mean(jnp.abs((targ - pred) / targ))


if __name__ == "__main__":
    key = jax.random.PRNGKey(0)
    k1, k2, k3, k4 = jax.random.split(key, 4)

    # Case 1: ragged N (pad-to-128 path) + 2-way core split + partial last block.
    # N=3000 -> 24 rows, br=16 -> 2 blocks, grid=(2, 1).
    N1 = 3000
    pred1 = jax.random.normal(k1, (N1, 1), dtype=jnp.float32) * 10.0 + 120.0
    targ1 = jax.random.normal(k2, (N1,), dtype=jnp.float32) * 10.0 + 120.0
    loss1 = sbp_loss(pred1, targ1, block_rows=16, force_pallas=True)
    jax.block_until_ready(loss1)
    assert jnp.allclose(loss1, _reference(pred1, targ1), rtol=1e-4, atol=1e-6), loss1

    # Case 2: lane-aligned N (zero-copy path) with an odd block count -> exercises
    # the clamped duplicate block on core 1 (must not double count).
    # N=6144 -> 48 rows, br=16 -> 3 blocks, grid=(2, 2).
    N2 = 6144
    pred2 = jax.random.normal(k3, (N2, 1), dtype=jnp.float32) * 10.0 + 120.0
    targ2 = jax.random.normal(k4, (N2,), dtype=jnp.float32) * 10.0 + 120.0
    loss2 = sbp_loss(pred2, targ2, block_rows=16, force_pallas=True)
    jax.block_until_ready(loss2)
    assert jnp.allclose(loss2, _reference(pred2, targ2), rtol=1e-4, atol=1e-6), loss2

    # Case 3: bf16 inputs streamed narrow and upcast in-kernel ((16,128) tiling).
    # N=4096 -> 32 rows, br=16 -> 2 blocks, grid=(2, 1).
    N3 = 4096
    pred3 = (jax.random.normal(k1, (N3, 1), dtype=jnp.float32) * 10.0 + 120.0).astype(jnp.bfloat16)
    targ3 = (jax.random.normal(k2, (N3,), dtype=jnp.float32) * 10.0 + 120.0).astype(jnp.bfloat16)
    loss3 = sbp_loss(pred3, targ3, block_rows=16, force_pallas=True)
    jax.block_until_ready(loss3)
    assert jnp.allclose(loss3, _reference(pred3, targ3), rtol=1e-3, atol=1e-5), loss3

    # Case 4: tiny batch like the original torch harness (N=8) — auto XLA fallback.
    pred4 = jax.random.normal(k3, (8, 1), dtype=jnp.float32) * 10.0 + 120.0
    targ4 = jax.random.normal(k4, (8,), dtype=jnp.float32) * 10.0 + 120.0
    loss4 = sbp_loss(pred4, targ4)
    jax.block_until_ready(loss4)
    assert jnp.allclose(loss4, _reference(pred4, targ4), rtol=1e-5, atol=1e-6), loss4

    print("KERNEL_OK")
</pallas_src>

<mosaic_0001>
module attributes {stable_mosaic.version = 11 : i64} {
  func.func @_sbp_loss_kernel(%arg0: i32, %arg1: i32, %arg2: memref<16x128xf32, #tpu.memory_space<vmem>>, %arg3: memref<16x128xf32, #tpu.memory_space<vmem>>, %arg4: memref<1x1x128xf32, #tpu.memory_space<vmem>>) attributes {dimension_semantics = [#tpu.dimension_semantics<parallel>, #tpu.dimension_semantics<arbitrary>], iteration_bounds = array<i64: 2, 1>, scalar_prefetch = 0 : i64, scratch_operands = 0 : i64, tpu.core_type = #tpu.core_type<tc>, window_params = [{transform_indices = @transform_0, window_bounds = array<i64: 16, 128>}, {transform_indices = @transform_1, window_bounds = array<i64: 16, 128>}, {transform_indices = @transform_2, window_bounds = array<i64: 1, 1, 128>}]} {
    %c0_i32 = arith.constant 0 : i32
    %0 = arith.cmpi eq, %arg1, %c0_i32 : i32
    %1 = arith.extui %0 : i1 to i32
    %c0_i32_0 = arith.constant 0 : i32
    %2 = arith.cmpi ne, %1, %c0_i32_0 : i32
    scf.if %2 {
      %cst_11 = arith.constant 0.000000e+00 : f32
      %26 = vector.broadcast %cst_11 : f32 to vector<1x1x128xf32>
      %c0_12 = arith.constant 0 : index
      %c0_13 = arith.constant 0 : index
      %c0_14 = arith.constant 0 : index
      %27 = vector.load %arg4[%c0_12, %c0_13, %c0_14] : memref<1x1x128xf32, #tpu.memory_space<vmem>>, vector<1x1x128xf32>
      tpu.vector_store %arg4[%c0_12, %c0_13, %c0_14], %26 {strides = array<i32>} : memref<1x1x128xf32, #tpu.memory_space<vmem>>, vector<1x1x128xf32>,
    } else {
    }
    %c0 = arith.constant 0 : index
    %c0_1 = arith.constant 0 : index
    %3 = vector.load %arg2[%c0, %c0_1] : memref<16x128xf32, #tpu.memory_space<vmem>>, vector<16x128xf32>
    %c0_2 = arith.constant 0 : index
    %c0_3 = arith.constant 0 : index
    %4 = vector.load %arg3[%c0_2, %c0_3] : memref<16x128xf32, #tpu.memory_space<vmem>>, vector<16x128xf32>
    %5 = arith.subf %4, %3 : vector<16x128xf32>
    %6 = arith.divf %5, %4 : vector<16x128xf32>
    %7 = math.absf %6 : vector<16x128xf32>
    %c1_i32 = arith.constant 1 : i32
    %8 = arith.muli %arg0, %c1_i32 : i32
    %9 = arith.addi %8, %arg1 : i32
    %c16_i32 = arith.constant 16 : i32
    %10 = arith.muli %9, %c16_i32 : i32
    %11 = tpu.iota {dimensions = array<i32: 0>} : vector<16x128xi32>
    %12 = vector.broadcast %10 : i32 to vector<16x128xi32>
    %13 = arith.addi %12, %11 : vector<16x128xi32>
    %c24_i32 = arith.constant 24 : i32
    %14 = vector.broadcast %c24_i32 : i32 to vector<16x128xi32>
    %15 = arith.cmpi slt, %13, %14 : vector<16x128xi32>
    %cst = arith.constant 0.000000e+00 : f32
    %16 = vector.broadcast %cst : f32 to vector<16x128xf32>
    %17 = arith.select %15, %7, %16 : vector<16x128xi1>, vector<16x128xf32>
    %c0_4 = arith.constant 0 : index
    %c0_5 = arith.constant 0 : index
    %c0_6 = arith.constant 0 : index
    %18 = vector.load %arg4[%c0_4, %c0_5, %c0_6] : memref<1x1x128xf32, #tpu.memory_space<vmem>>, vector<1x1x128xf32>
    %19 = vector.shape_cast %18 : vector<1x1x128xf32> to vector<1x128xf32>
    %cst_7 = arith.constant dense<0.000000e+00> : vector<128xf32>
    %20 = vector.multi_reduction <add>, %17, %cst_7 [0] : vector<16x128xf32> to vector<128xf32>
    %21 = vector.shape_cast %20 : vector<128xf32> to vector<1x128xf32>
    %22 = arith.addf %19, %21 : vector<1x128xf32>
    %c0_8 = arith.constant 0 : index
    %c0_9 = arith.constant 0 : index
    %c0_10 = arith.constant 0 : index
    %23 = vector.load %arg4[%c0_8, %c0_9, %c0_10] : memref<1x1x128xf32, #tpu.memory_space<vmem>>, vector<1x1x128xf32>
    %24 = vector.shape_cast %23 : vector<1x1x128xf32> to vector<1x128xf32>
    %25 = vector.shape_cast %22 : vector<1x128xf32> to vector<1x1x128xf32>
    tpu.vector_store %arg4[%c0_8, %c0_9, %c0_10], %25 {strides = array<i32>} : memref<1x1x128xf32, #tpu.memory_space<vmem>>, vector<1x1x128xf32>,
    return
  }
  func.func @transform_0(%arg0: i32, %arg1: i32) -> (i32, i32) {
    %c1_i32 = arith.constant 1 : i32
    %0 = arith.muli %arg0, %c1_i32 : i32
    %1 = arith.addi %0, %arg1 : i32
    %c1_i32_0 = arith.constant 1 : i32
    %2 = arith.minsi %1, %c1_i32_0 : i32
    %c0_i32 = arith.constant 0 : i32
    %c0_i32_1 = arith.constant 0 : i32
    return %2, %c0_i32 : i32, i32
  }
  func.func @transform_1(%arg0: i32, %arg1: i32) -> (i32, i32) {
    %c1_i32 = arith.constant 1 : i32
    %0 = arith.muli %arg0, %c1_i32 : i32
    %1 = arith.addi %0, %arg1 : i32
    %c1_i32_0 = arith.constant 1 : i32
    %2 = arith.minsi %1, %c1_i32_0 : i32
    %c0_i32 = arith.constant 0 : i32
    %c0_i32_1 = arith.constant 0 : i32
    return %2, %c0_i32 : i32, i32
  }
  func.func @transform_2(%arg0: i32, %arg1: i32) -> (i32, i32, i32) {
    %c0_i32 = arith.constant 0 : i32
    %c0_i32_0 = arith.constant 0 : i32
    %c0_i32_1 = arith.constant 0 : i32
    return %arg0, %c0_i32, %c0_i32_0 : i32, i32, i32
  }
}

</mosaic_0001>

<llo_original>
// kernel: tpu_custom_call.1
$region0: #{tpu_custom_call.1}
  #allocation0 [shape = 'u32[]', space=smem, size = 0x4, offset = 0x4, fixed_abs, tag = 'smem constant byte address 0x4 - core index']
  #allocation1 [shape = 'u32[144,128]{1,0:T(1,128)}', space=vmem, size = 0x12000, scoped, tag = 'internal scratch']
  %s0 = inlined_call_operand.hbm [shape: f32[24,128], index: 0, kind: input, shape index: {}]
  %s1 = inlined_call_operand.hbm [shape: f32[24,128], index: 1, kind: input, shape index: {}]
  %s2 = inlined_call_operand.hbm [shape: f32[2,1,128], index: 2, kind: output, shape index: {}]
  %s3 = sld [smem:[#allocation0]]
  $region53: #{tpu_custom_call.1} parent=0
    _
  %s5 = ssub.s32 1, %s3
  %s6 = scalar_select 0, %s5, %s3
  $region1: #{tpu_custom_call.1} parent=0
    #allocation2 [shape = 'u8[16384]{0}', space=vmem, size = 0x4000, scoped, tag = 'input window, operand 0']
    #allocation3 [shape = 's32[2]{0}', space=sflag, size = 0x8, scoped, tag = 'scoped memory for tpu_custom_call.1']
    #allocation4 [shape = 's32[2]{0}', space=sflag, size = 0x8, scoped, tag = 'scoped memory for tpu_custom_call.1']
    #allocation5 [shape = 'u8[16384]{0}', space=vmem, size = 0x4000, scoped, tag = 'input window, operand 1']
    #allocation6 [shape = 's32[2]{0}', space=sflag, size = 0x8, scoped, tag = 'scoped memory for tpu_custom_call.1']
    #allocation7 [shape = 'u8[1024]{0}', space=vmem, size = 0x400, scoped, tag = 'output window, operand 0']
    %7 = vsyncpa [#allocation3], 0
    %s8 = scalar_lea.sflag [#allocation3], 1
    %9 = vsyncpa %s8, 0
    %10 = vsyncpa [#allocation6], 0
    %s11 = scalar_lea.sflag [#allocation6], 1
    %12 = vsyncpa %s11, 0
    %13 = vsyncpa [#allocation4], 0
    %s14 = scalar_lea.sflag [#allocation4], 1
    %15 = vsyncpa %s14, 0
    loop: start=0, step=1, limit=4
    $region2: #{tpu_custom_call.1} parent=1 // loop_pre_header
      _
    $region3: #{tpu_custom_call.1} parent=1 // loop_header
      %s17 = sphi 0, %s21
      %p18 = scmp.ge.s32.totalorder %s17, 4
      %s24 = sphi 0, %s36
      %s25 = sphi 0, %s32
      %s26 = sphi 0, %s24
      %s27 = sphi 0, %s25
      %s28 = sphi 0, %s26
      %s29 = sphi 0, %s27
      %s45 = sphi 0, %s47
      %s48 = sphi 0, %s45
      %s49 = sphi 0, %s48
      %s65 = sphi 0, %s49
      %s77 = sphi 0, %s79
      %s80 = sphi 0, %s77
      %s81 = sphi 0, %s80
      %s97 = sphi 0, %s81
      %s103 = sphi 0, %s105
      %s106 = sphi 0, %s103
      %s107 = sphi 0, %s106
      %s123 = sphi 0, %s107
    $region4: #{tpu_custom_call.1} parent=1 // loop_header_branch
      %20 = sbr.rel (%p18) target = $region8
    $region5: #{tpu_custom_call.1} parent=1 // loop_body
      %s22 = ssub.s32 %s17, 1
      %s23 = ssub.s32 %s17, 2
      %s30 = sadd.s32 1, %s25
      %p31 = scmp.ge.s32.totalorder %s30, 1
      %s32 = scalar_select %p31, 0, %s30
      %s33 = sadd.s32 1, %s24
      %s34 = scalar_select %p31, %s33, %s24
      %p35 = scmp.ge.s32.totalorder %s34, 2
      %s36 = scalar_select %p35, 0, %s34
      %s37 = sadd.s32 %s24, %s25
      %p38 = scmp.lt.s32.totalorder %s37, 1
      %s39 = scalar_select %p38, %s37, 1
      %s40 = sadd.s32 %s36, %s32
      %p41 = scmp.lt.s32.totalorder %s40, 1
      %s42 = scalar_select %p41, %s40, 1
      %s43 = ssub.s32 %s39, %s42
      %p44 = scmp.eq.s32.totalorder %s43, 0
      %s46 = sadd.s32 %s45, 1
      %s47 = scalar_select %p44, %s45, %s46
      %p50 = pneg %p44
      %p51 = scmp.eq.s32.totalorder %s17, 1
      %p52 = por %p50, %p51
      %p53 = scmp.ne.s32.totalorder %s45, %s48
      %p54 = scmp.eq.s32.totalorder %s17, 0
      %p55 = por %p53, %p54
      %p56 = scmp.ne.s32.totalorder %s45, %s48
      %p57 = scmp.eq.s32.totalorder %s22, 1
      %p58 = por %p56, %p57
      %p59 = scmp.ne.s32.totalorder %s48, %s49
      %p60 = scmp.eq.s32.totalorder %s22, 0
      %p61 = por %p59, %p60
      %p62 = scmp.ne.s32.totalorder %s48, %s49
      %p63 = scmp.eq.s32.totalorder %s23, 1
      %p64 = por %p62, %p63
      %p66 = scmp.ne.s32.totalorder %s49, %s65
      %p67 = scmp.eq.s32.totalorder %s23, 0
      %p68 = por %p66, %p67
      %s69 = sadd.s32 %s24, %s25
      %p70 = scmp.lt.s32.totalorder %s69, 1
      %s71 = scalar_select %p70, %s69, 1
      %s72 = sadd.s32 %s36, %s32
      %p73 = scmp.lt.s32.totalorder %s72, 1
      %s74 = scalar_select %p73, %s72, 1
      %s75 = ssub.s32 %s71, %s74
      %p76 = scmp.eq.s32.totalorder %s75, 0
      %s78 = sadd.s32 %s77, 1
      %s79 = scalar_select %p76, %s77, %s78
      %p82 = pneg %p76
      %p83 = scmp.eq.s32.totalorder %s17, 1
      %p84 = por %p82, %p83
      %p85 = scmp.ne.s32.totalorder %s77, %s80
      %p86 = scmp.eq.s32.totalorder %s17, 0
      %p87 = por %p85, %p86
      %p88 = scmp.ne.s32.totalorder %s77, %s80
      %p89 = scmp.eq.s32.totalorder %s22, 1
      %p90 = por %p88, %p89
      %p91 = scmp.ne.s32.totalorder %s80, %s81
      %p92 = scmp.eq.s32.totalorder %s22, 0
      %p93 = por %p91, %p92
      %p94 = scmp.ne.s32.totalorder %s80, %s81
      %p95 = scmp.eq.s32.totalorder %s23, 1
      %p96 = por %p94, %p95
      %p98 = scmp.ne.s32.totalorder %s81, %s97
      %p99 = scmp.eq.s32.totalorder %s23, 0
      %p100 = por %p98, %p99
      %s101 = ssub.s32 %s24, %s36
      %p102 = scmp.eq.s32.totalorder %s101, 0
      %s104 = sadd.s32 %s103, 1
      %s105 = scalar_select %p102, %s103, %s104
      %p108 = pneg %p102
      %p109 = scmp.eq.s32.totalorder %s17, 1
      %p110 = por %p108, %p109
      %p111 = scmp.ne.s32.totalorder %s103, %s106
      %p112 = scmp.eq.s32.totalorder %s17, 0
      %p113 = por %p111, %p112
      %p114 = scmp.ne.s32.totalorder %s103, %s106
      %p115 = scmp.eq.s32.totalorder %s22, 1
      %p116 = por %p114, %p115
      %p117 = scmp.ne.s32.totalorder %s106, %s107
      %p118 = scmp.eq.s32.totalorder %s22, 0
      %p119 = por %p117, %p118
      %p120 = scmp.ne.s32.totalorder %s106, %s107
      %p121 = scmp.eq.s32.totalorder %s23, 1
      %p122 = por %p120, %p121
      %p124 = scmp.ne.s32.totalorder %s107, %s123
      %p125 = scmp.eq.s32.totalorder %s23, 0
      %p126 = por %p124, %p125
      %p127 = scmp.le.s32.totalorder 1, %s17
      %p128 = scmp.lt.s32.totalorder %s17, 3
      %p129 = pnand %p127, %p128
      %p130 = pneg %p129
      // Predicated region
      $region9: #{tpu_custom_call.1} parent=5 // pred_check
        _
      $region10: #{tpu_custom_call.1} parent=5 // pred_check_branch
        %132 = sbr.rel (%p129) target = $region12
      $region11: #{tpu_custom_call.1} parent=5 // pred_region
        %s133 = ssub.s32 %s17, 1
      $region12: #{tpu_custom_call.1} parent=5 // pred_fallthru
        _
      %p134 = scmp.lt.s32.totalorder %s17, 2
      // Predicated region
      $region13: #{tpu_custom_call.1} parent=5 // pred_check
        %p135 = pneg %p134
      $region14: #{tpu_custom_call.1} parent=5 // pred_check_branch
        %137 = sbr.rel (%p135) target = $region16
      $region15: #{tpu_custom_call.1} parent=5 // pred_region
        // Predicated region
        $region17: #{tpu_custom_call.1} parent=15 // pred_check
          %p138 = pneg %p55
        $region18: #{tpu_custom_call.1} parent=15 // pred_check_branch
          %140 = sbr.rel (%p138) target = $region20
        $region19: #{tpu_custom_call.1} parent=15 // pred_region
          %s141 = sand.u32 %s45, 1
          %s142 = scalar_lea.sflag [#allocation3], %s141
          %s143 = sand.u32 %s45, 1
          %s144 = smul.addr %s143, 16
          %s145 = scalar_lea.vmem [#allocation2], %s144
          %s146 = sadd.s32 %s24, %s25
          %p147 = scmp.lt.s32.totalorder %s146, 1
          %s148 = scalar_select %p147, %s146, 1
          %s149 = smul.u32 2, %s148
          %s150 = ssub.s32 3, %s149
          %p151 = scmp.lt.s32.totalorder %s150, 2
          %s152 = scalar_select %p151, %s150, 2
          %s153 = smul.u32 128, %s152
          %s155 = ssub.s32 256, %s153
          %156 = vsyncadd %s142, %s155
          %p157 = scmp.ne.s32.totalorder 0, %s153
          %s158 = smul.addr %s149, 128
          %s159 = scalar_lea.hbm %s0, %s158
          %s160 = smul.u32 8, %s152
          %s161 = sshll.u32 %s145, 4
          %s162 = int_to_ptr.vmem [resolvable:$true] %s161
          %s163 = sshll.u32 %s160, 4
          %167 = dma.hbm_to_vmem [thread:$0]  (%p157), %s159, %s163, %s162, %s142, 128, 128, 8
        $region20: #{tpu_custom_call.1} parent=15 // pred_fallthru
          _
        // Predicated region
        $region21: #{tpu_custom_call.1} parent=15 // pred_check
          %p168 = pneg %p87
        $region22: #{tpu_custom_call.1} parent=15 // pred_check_branch
          %170 = sbr.rel (%p168) target = $region24
        $region23: #{tpu_custom_call.1} parent=15 // pred_region
          %s171 = sand.u32 %s77, 1
          %s172 = scalar_lea.sflag [#allocation6], %s171
          %s173 = sand.u32 %s77, 1
          %s174 = smul.addr %s173, 16
          %s175 = scalar_lea.vmem [#allocation5], %s174
          %s176 = sadd.s32 %s24, %s25
          %p177 = scmp.lt.s32.totalorder %s176, 1
          %s178 = scalar_select %p177, %s176, 1
          %s179 = smul.u32 2, %s178
          %s180 = ssub.s32 3, %s179
          %p181 = scmp.lt.s32.totalorder %s180, 2
          %s182 = scalar_select %p181, %s180, 2
          %s183 = smul.u32 128, %s182
          %s185 = ssub.s32 256, %s183
          %186 = vsyncadd %s172, %s185
          %p187 = scmp.ne.s32.totalorder 0, %s183
          %s188 = smul.addr %s179, 128
          %s189 = scalar_lea.hbm %s1, %s188
          %s190 = smul.u32 8, %s182
          %s191 = sshll.u32 %s175, 4
          %s192 = int_to_ptr.vmem [resolvable:$true] %s191
          %s193 = sshll.u32 %s190, 4
          %197 = dma.hbm_to_vmem [thread:$0]  (%p187), %s189, %s193, %s192, %s172, 128, 128, 8
        $region24: #{tpu_custom_call.1} parent=15 // pred_fallthru
          _
      $region16: #{tpu_custom_call.1} parent=5 // pred_fallthru
        _
      %p198 = scmp.le.s32.totalorder 1, %s17
      %p199 = scmp.lt.s32.totalorder %s17, 3
      %p200 = pnand %p198, %p199
      %p201 = pneg %p200
      // Predicated region
      $region25: #{tpu_custom_call.1} parent=5 // pred_check
        _
      $region26: #{tpu_custom_call.1} parent=5 // pred_check_branch
        %203 = sbr.rel (%p200) target = $region28
      $region27: #{tpu_custom_call.1} parent=5 // pred_region
        %s204 = ssub.s32 %s17, 1
        %s205 = sand.u32 %s48, 1
        %s206 = scalar_lea.sflag [#allocation3], %s205
        %s207 = sand.u32 %s48, 1
        %s208 = smul.addr %s207, 16
        %s209 = scalar_lea.vmem [#allocation2], %s208
        // Predicated region
        $region29: #{tpu_custom_call.1} parent=27 // pred_check
          %p210 = pneg %p61
        $region30: #{tpu_custom_call.1} parent=27 // pred_check_branch
          %212 = sbr.rel (%p210) target = $region32
        $region31: #{tpu_custom_call.1} parent=27 // pred_region
          %213 = dma.done %s206, 256
        $region32: #{tpu_custom_call.1} parent=27 // pred_fallthru
          _
        %s214 = sand.u32 %s80, 1
        %s215 = scalar_lea.sflag [#allocation6], %s214
        %s216 = sand.u32 %s80, 1
        %s217 = smul.addr %s216, 16
        %s218 = scalar_lea.vmem [#allocation5], %s217
        // Predicated region
        $region33: #{tpu_custom_call.1} parent=27 // pred_check
          %p219 = pneg %p93
        $region34: #{tpu_custom_call.1} parent=27 // pred_check_branch
          %221 = sbr.rel (%p219) target = $region36
        $region35: #{tpu_custom_call.1} parent=27 // pred_region
          %222 = dma.done %s215, 256
        $region36: #{tpu_custom_call.1} parent=27 // pred_fallthru
          _
        %s223 = sand.u32 %s48, 1
        %s224 = scalar_lea.sflag [#allocation3], %s223
        %s225 = sand.u32 %s48, 1
        %s226 = smul.addr %s225, 16
        %s227 = scalar_lea.vmem [#allocation2], %s226
        %p228 = pneg %p61
        %p229 = pneg %p58
        %s230 = sand.u32 %s80, 1
        %s231 = scalar_lea.sflag [#allocation6], %s230
        %s232 = sand.u32 %s80, 1
        %s233 = smul.addr %s232, 16
        %s234 = scalar_lea.vmem [#allocation5], %s233
        %p235 = pneg %p93
        %p236 = pneg %p90
        %p237 = pneg %p119
        %p238 = pneg %p116
        %s239 = sand.u32 %s106, 1
        %s240 = scalar_lea.sflag [#allocation4], %s239
        %s241 = sand.u32 %s106, 1
        %s242 = scalar_lea.vmem [#allocation7], %s241
        %s243 = sadd.s32 %s26, %s27
        %p244 = scmp.lt.s32.totalorder %s243, 1
        %s245 = scalar_select %p244, %s243, 1
        %s246 = smul.u32 2, %s245
        %s247 = ssub.s32 3, %s246
        %p248 = scmp.lt.s32.totalorder %s247, 2
        %s249 = scalar_select %p248, %s247, 2
        %s250 = smul.u32 128, %s249
        %s251 = sadd.s32 %s26, %s27
        %p252 = scmp.lt.s32.totalorder %s251, 1
        %s253 = scalar_select %p252, %s251, 1
        %s254 = smul.u32 2, %s253
        %s255 = ssub.s32 3, %s254
        %p256 = scmp.lt.s32.totalorder %s255, 2
        %s257 = scalar_select %p256, %s255, 2
        %s258 = smul.u32 128, %s257
        %p259 = scmp.eq.s32.totalorder %s27, 0
        // Predicated region
        $region37: #{tpu_custom_call.1} parent=27 // pred_check
          %p260 = pneg %p259
        $region38: #{tpu_custom_call.1} parent=27 // pred_check_branch
          %262 = sbr.rel (%p260) target = $region40
        $region39: #{tpu_custom_call.1} parent=27 // pred_region
          %263 = vst [vmem:[%s242] sm:$0x1] 0.0
        $region40: #{tpu_custom_call.1} parent=27 // pred_fallthru
          _
        %v264 = vld [vmem:[%s209] sm:$0xff]
        %v265 = vld [vmem:[%s209 + $0x8] sm:$0xff]
        %v266 = vld [vmem:[%s218] sm:$0xff]
        %v267 = vld [vmem:[%s218 + $0x8] sm:$0xff]
        %v268 = vsub.f32 %v266, %v264
        %v269 = vsub.f32 %v267, %v265
        %v270 = vrcp.pop %v266
        %v271 = vmul.f32 %v268, %v270
        %v272 = vrcp.pop %v267
        %v273 = vmul.f32 %v269, %v272
        %v274 = vand.u32 2147483647, %v271
        %v275 = vand.u32 2147483647, %v273
        %s276 = sadd.s32 %s26, %s27
        %s277 = smul.u32 %s276, 16
        %v278 = vlaneseq
        %v279 = vshrl.u32 %v278, 7
        %v280 = vadd.s32 %v279, 8
        %v281 = vstv %s277
        %v282 = vadd.s32 %v281, %v279
        %v283 = vadd.s32 %v281, %v280
        %vm284 = vcmp.lt.s32.totalorder %v282, 24
        %vm285 = vcmp.lt.s32.totalorder %v283, 24
        %v286 = vsel %vm284, %v274, 0.0
        %v287 = vsel %vm285, %v275, 0.0
        %v288 = vld [vmem:[%s242] sm:$0x1]
        %v289 = vadd.f32 %v286, %v287
        %v290 = vrot.slane %v289, 4
        %v291 = vadd.f32 %v289, %v290
        %v292 = vrot.slane %v291, 2
        %v293 = vadd.f32 %v291, %v292
        %v294 = vrot.slane %v293, 1
        %v295 = vadd.f32 %v293, %v294
        %v296 = vadd.f32 %v288, %v295
        %297 = vst [vmem:[%s242] sm:$0x1] %v296
        %s298 = sand.u32 %s106, 1
        %s299 = scalar_lea.sflag [#allocation4], %s298
        %s300 = sand.u32 %s106, 1
        %s301 = scalar_lea.vmem [#allocation7], %s300
        // Predicated region
        $region41: #{tpu_custom_call.1} parent=27 // pred_check
          %p302 = pneg %p116
        $region42: #{tpu_custom_call.1} parent=27 // pred_check_branch
          %304 = sbr.rel (%p302) target = $region44
        $region43: #{tpu_custom_call.1} parent=27 // pred_region
          %s306 = ssub.s32 16, 16
          %307 = vsyncadd %s299, %s306
          %s308 = smul.addr %s26, 16
          %s309 = scalar_lea.hbm %s2, %s308
          %s311 = sshll.u32 %s301, 4
          %s312 = int_to_ptr.vmem [resolvable:$true] %s311
          %314 = dma.vmem_to_hbm [thread:$0]  %s312, 16, %s309, %s299
        $region44: #{tpu_custom_call.1} parent=27 // pred_fallthru
          _
      $region28: #{tpu_custom_call.1} parent=5 // pred_fallthru
        _
      %p315 = scmp.le.s32.totalorder 2, %s17
      // Predicated region
      $region45: #{tpu_custom_call.1} parent=5 // pred_check
        %p316 = pneg %p315
      $region46: #{tpu_custom_call.1} parent=5 // pred_check_branch
        %318 = sbr.rel (%p316) target = $region48
      $region47: #{tpu_custom_call.1} parent=5 // pred_region
        %s319 = ssub.s32 %s17, 2
        // Predicated region
        $region49: #{tpu_custom_call.1} parent=47 // pred_check
          %p320 = pneg %p122
        $region50: #{tpu_custom_call.1} parent=47 // pred_check_branch
          %322 = sbr.rel (%p320) target = $region52
        $region51: #{tpu_custom_call.1} parent=47 // pred_region
          %s323 = sand.u32 %s107, 1
          %s324 = scalar_lea.sflag [#allocation4], %s323
          %s325 = sand.u32 %s107, 1
          %s326 = scalar_lea.vmem [#allocation7], %s325
          %327 = dma.done %s324, 16
        $region52: #{tpu_custom_call.1} parent=47 // pred_fallthru
          _
      $region48: #{tpu_custom_call.1} parent=5 // pred_fallthru
        _
    $region6: #{tpu_custom_call.1} parent=1 // loop_footer
      %s21 = sadd.s32 1, %s17
    $region7: #{tpu_custom_call.1} parent=1 // loop_footer_branch
      %16 = sbr.rel target = $region3
    $region8: #{tpu_custom_call.1} parent=1 // loop_exit
      _
    %328 = vsyncpa [#allocation3], 1
    %s329 = scalar_lea.sflag [#allocation3], 1
    %330 = vsyncpa %s329, 1
    %331 = vsyncpa [#allocation6], 1
    %s332 = scalar_lea.sflag [#allocation6], 1
    %333 = vsyncpa %s332, 1
    %334 = vsyncpa [#allocation4], 1
    %s335 = scalar_lea.sflag [#allocation4], 1
    %336 = vsyncpa %s335, 1

</llo_original>
